<compile_context>
chip_gen: v5e
topology: v5e:2x2
jax: 0.10.0
libtpu: 0.0.40
codegen_flags: <defaults>
</compile_context>

<pallas_src>
import math
from functools import partial

import numpy as np
import jax
import jax.numpy as jnp
from jax.experimental import pallas as pl
from jax.experimental.pallas import tpu as pltpu


def build_pe(d_model: int, max_len: int) -> jnp.ndarray:
    """Sinusoidal positional-encoding buffer, shape (max_len, 1, d_model) (matches the torch buffer)."""
    position = jnp.arange(max_len, dtype=jnp.float32)[:, None]
    div_term = jnp.exp(jnp.arange(0, d_model, 2, dtype=jnp.float32) * (-math.log(10000.0) / d_model))
    pe = jnp.zeros((max_len, d_model), dtype=jnp.float32)
    pe = pe.at[:, 0::2].set(jnp.sin(position * div_term))
    pe = pe.at[:, 1::2].set(jnp.cos(position * div_term))
    return pe[:, None, :]


def _keep_threshold(keep_prob: float) -> int:
    """uint32 threshold such that P(bits < thresh) == keep_prob (exact to 2^-32)."""
    return min(int(round(keep_prob * 2.0 ** 32)), 2 ** 32 - 1)


def _lane_tile(v, reps: int):
    """(rows, d) -> (rows, d*reps): replicate along the lane axis.  VMEM-only, no HBM traffic."""
    if reps == 1:
        return v
    return jnp.concatenate([v] * reps, axis=-1)


def _make_kernel(batch: int, p: float, use_dropout: bool):
    keep_prob = 1.0 - p

    if use_dropout:
        thresh = np.uint32(_keep_threshold(keep_prob))
        inv_keep = 1.0 / keep_prob

        def kernel(x_ref, pe_ref, bits_ref, o_ref):
            y = x_ref[...] + _lane_tile(pe_ref[...], batch)   # broadcast pe over batch, in-VMEM
            keep = bits_ref[...] < thresh                     # exact Bernoulli(keep_prob)
            o_ref[...] = jnp.where(keep, y * inv_keep, 0.0).astype(o_ref.dtype)

        return kernel

    def kernel(x_ref, pe_ref, o_ref):
        o_ref[...] = (x_ref[...] + _lane_tile(pe_ref[...], batch)).astype(o_ref.dtype)

    return kernel


# Conservative double-buffered tile footprint target; fits v7x's scoped VMEM with headroom.
_VMEM_TILE_BUDGET_BYTES = 12 * 1024 * 1024
_VMEM_LIMIT_BYTES = 32 * 1024 * 1024


def _pick_row_tile(n_rows: int, bytes_per_row: int) -> int:
    """Largest row tile (multiple of 8, or the full extent) whose double-buffered footprint fits."""
    max_rows = max(8, _VMEM_TILE_BUDGET_BYTES // (2 * bytes_per_row))
    if n_rows <= max_rows:
        return n_rows                       # full extent is always a legal block dim
    return max(8, (max_rows // 8) * 8)


@partial(jax.jit, static_argnames=("p", "training"))
def positional_encoding(x, pe, key=None, *, p: float = 0.1, training: bool = False):
    """x: (S, B, D); pe: (max_len, 1, D).  Returns dropout(x + pe[:S]) with inverted-dropout scaling."""
    S, B, D = x.shape
    W = B * D
    x2 = x.reshape(S, W)                    # free: contiguous row-major view, lane-dense last dim
    pe2 = pe[:S, 0, :]                      # (S, D) — tiny, 1/B of x's HBM traffic

    use_dropout = bool(training) and p > 0.0
    n_streams = 3 if use_dropout else 2     # x (+bits) + out, all (rows, W); pe is negligible
    tile_rows = _pick_row_tile(S, (n_streams * W + D) * x.dtype.itemsize)
    grid = (pl.cdiv(S, tile_rows),)

    row_spec = pl.BlockSpec((tile_rows, W), lambda i: (i, 0))
    pe_spec = pl.BlockSpec((tile_rows, D), lambda i: (i, 0))
    cparams = pltpu.CompilerParams(
        dimension_semantics=("parallel",),  # megacore sharding on v7x; no-op on v5e/v6e
        vmem_limit_bytes=_VMEM_LIMIT_BYTES,
    )
    out_shape = jax.ShapeDtypeStruct((S, W), x.dtype)

    if use_dropout:
        bits = jax.random.bits(key, (S, W), jnp.uint32)
        out2 = pl.pallas_call(
            _make_kernel(B, p, True),
            out_shape=out_shape,
            grid=grid,
            in_specs=[row_spec, pe_spec, row_spec],
            out_specs=row_spec,
            compiler_params=cparams,
        )(x2, pe2, bits)
    else:
        out2 = pl.pallas_call(
            _make_kernel(B, p, False),
            out_shape=out_shape,
            grid=grid,
            in_specs=[row_spec, pe_spec],
            out_specs=row_spec,
            compiler_params=cparams,
        )(x2, pe2)

    return out2.reshape(S, B, D)


if __name__ == "__main__":
    d_model, max_len, seq_len, batch, dropout_p = 32, 64, 8, 2, 0.1

    root = jax.random.PRNGKey(0)
    kx, kdrop = jax.random.split(root)
    x = jax.random.normal(kx, (seq_len, batch, d_model), dtype=jnp.float32)
    pe = build_pe(d_model, max_len)

    # Eval mode (dropout = identity): exact check vs the reference.
    out_eval = jax.block_until_ready(positional_encoding(x, pe, p=dropout_p, training=False))
    ref_eval = x + pe[:seq_len]
    assert out_eval.shape == x.shape and out_eval.dtype == x.dtype
    assert jnp.allclose(out_eval, ref_eval, atol=1e-6, rtol=1e-6), "eval-mode mismatch"

    # Training mode: the dropout bits are reproducible from the key, so the check is exact.
    out_train = jax.block_until_ready(positional_encoding(x, pe, kdrop, p=dropout_p, training=True))
    bits = jax.random.bits(kdrop, (seq_len, batch * d_model), jnp.uint32).reshape(x.shape)
    keep = bits < np.uint32(_keep_threshold(1.0 - dropout_p))
    ref_train = jnp.where(keep, ref_eval * (1.0 / (1.0 - dropout_p)), 0.0)
    assert out_train.shape == x.shape
    assert jnp.allclose(out_train, ref_train, atol=1e-5, rtol=1e-5), "train-mode mismatch"

    print("KERNEL_OK")
</pallas_src>

<mosaic_0001>
module attributes {stable_mosaic.version = 11 : i64} {
  func.func @kernel(%arg0: i32, %arg1: memref<8x64xf32, #tpu.memory_space<vmem>>, %arg2: memref<8x32xf32, #tpu.memory_space<vmem>>, %arg3: memref<8x64xf32, #tpu.memory_space<vmem>>) attributes {dimension_semantics = [#tpu.dimension_semantics<parallel>], iteration_bounds = array<i64: 1>, scalar_prefetch = 0 : i64, scratch_operands = 0 : i64, tpu.core_type = #tpu.core_type<tc>, window_params = [{transform_indices = @transform_0, window_bounds = array<i64: 8, 64>}, {transform_indices = @transform_1, window_bounds = array<i64: 8, 32>}, {transform_indices = @transform_2, window_bounds = array<i64: 8, 64>}]} {
    %c0 = arith.constant 0 : index
    %c0_0 = arith.constant 0 : index
    %0 = vector.load %arg1[%c0, %c0_0] : memref<8x64xf32, #tpu.memory_space<vmem>>, vector<8x64xf32>
    %c0_1 = arith.constant 0 : index
    %c0_2 = arith.constant 0 : index
    %1 = vector.load %arg2[%c0_1, %c0_2] : memref<8x32xf32, #tpu.memory_space<vmem>>, vector<8x32xf32>
    %2 = tpu.concatenate %1, %1 in 1 : vector<8x32xf32>, vector<8x32xf32> -> vector<8x64xf32>
    %3 = arith.addf %0, %2 : vector<8x64xf32>
    %c0_3 = arith.constant 0 : index
    %c0_4 = arith.constant 0 : index
    %4 = vector.load %arg3[%c0_3, %c0_4] : memref<8x64xf32, #tpu.memory_space<vmem>>, vector<8x64xf32>
    tpu.vector_store %arg3[%c0_3, %c0_4], %3 {strides = array<i32>} : memref<8x64xf32, #tpu.memory_space<vmem>>, vector<8x64xf32>,
    return
  }
  func.func @transform_0(%arg0: i32) -> (i32, i32) {
    %c0_i32 = arith.constant 0 : i32
    %c0_i32_0 = arith.constant 0 : i32
    return %arg0, %c0_i32 : i32, i32
  }
  func.func @transform_1(%arg0: i32) -> (i32, i32) {
    %c0_i32 = arith.constant 0 : i32
    %c0_i32_0 = arith.constant 0 : i32
    return %arg0, %c0_i32 : i32, i32
  }
  func.func @transform_2(%arg0: i32) -> (i32, i32) {
    %c0_i32 = arith.constant 0 : i32
    %c0_i32_0 = arith.constant 0 : i32
    return %arg0, %c0_i32 : i32, i32
  }
}

</mosaic_0001>

<llo_original>
// kernel: positional_encoding.1
$region0: #{positional_encoding.1}
  #allocation0 [shape = 'u32[]', space=smem, size = 0x4, offset = 0x4, fixed_abs, tag = 'smem constant byte address 0x4 - core index']
  #allocation1 [shape = 'u32[72,128]{1,0:T(1,128)}', space=vmem, size = 0x9000, scoped, tag = 'internal scratch']
  %s0 = inlined_call_operand.vmem [shape: f32[8,64], index: 0, kind: input, shape index: {}]
  %s1 = inlined_call_operand.vmem [shape: f32[8,32], index: 1, kind: input, shape index: {}]
  %s2 = inlined_call_operand.vmem [shape: f32[8,64], index: 2, kind: output, shape index: {}]
  %s3 = sld [smem:[#allocation0]]
  $region18: #{positional_encoding.1} parent=0
    _
  %s5 = ssub.s32 1, %s3
  %s6 = scalar_select 0, %s5, %s3
  // Predicated region
  $region2: #{positional_encoding.1} parent=0 // pred_check
    _
  $region3: #{positional_encoding.1} parent=0 // pred_check_branch
    %8 = sbr.rel (0) target = $region5
  $region4: #{positional_encoding.1} parent=0 // pred_region
    _
  $region5: #{positional_encoding.1} parent=0 // pred_fallthru
    _
  // Predicated region
  $region6: #{positional_encoding.1} parent=0 // pred_check
    _
  $region7: #{positional_encoding.1} parent=0 // pred_check_branch
    %10 = sbr.rel (0) target = $region9
  $region8: #{positional_encoding.1} parent=0 // pred_region
    _
  $region9: #{positional_encoding.1} parent=0 // pred_fallthru
    _
  %v11 = vld [vmem:[%s0] sm:$0xff]
  %v12 = vld [vmem:[%s1] sm:$0xff]
  %14 = vrot.lane.b32.xlu0 %v12, 32
  %v15 = vpop.permute.xlu0 %14
  %vm17 = vcmask 261120
  %v18 = vsel %vm17, %v12, %v15
  %v19 = vadd.f32 %v11, %v18
  %vm20 = vcmask 523264
  %21 = vst.msk [vmem:[%s2] sm:$0xff] %vm20, %v19
  // Predicated region
  $region10: #{positional_encoding.1} parent=0 // pred_check
    _
  $region11: #{positional_encoding.1} parent=0 // pred_check_branch
    %23 = sbr.rel (0) target = $region13
  $region12: #{positional_encoding.1} parent=0 // pred_region
    _
  $region13: #{positional_encoding.1} parent=0 // pred_fallthru
    _
  // Predicated region
  $region14: #{positional_encoding.1} parent=0 // pred_check
    _
  $region15: #{positional_encoding.1} parent=0 // pred_check_branch
    %25 = sbr.rel (0) target = $region17
  $region16: #{positional_encoding.1} parent=0 // pred_region
    _
  $region17: #{positional_encoding.1} parent=0 // pred_fallthru
    _

</llo_original>
